<compile_context>
chip_gen: v5e
topology: v5e:2x2
jax: 0.10.0
libtpu: 0.0.40
codegen_flags: <defaults>
</compile_context>

<pallas_src>
import jax
import jax.numpy as jnp
import numpy as np
from jax.experimental import pallas as pl
from jax.experimental.pallas import tpu as pltpu


def ncf_kernel(g_ref, m_ref, w1_ref, pk_ref, out_ref, b_scr):
    """One tile of tg graphs x all M models -> (tg, M) score block.

    g_ref  : (tg, F)  graph-embedding tile           (compute dtype)
    m_ref  : (M, F)   full model-embedding table     (compute dtype, resident)
    w1_ref : (2F, H)  W1.T; rows [0:F] = graph half, [F:2F] = model half
    pk_ref : (4, H)   packed f32 params:
                        row0 = b1
                        row1 = v   = W2.T @ w3[:, :H].T   (fused 2nd Linear)
                        row2 = w3b = w3[:, H:]            (elementwise head)
                        row3 = [c, 0, ...],  c = b2 @ w3a + b3
    out_ref: (tg, M)  scores
    b_scr  : (M, H)   f32 scratch for the model half of layer 1
    """
    F = g_ref.shape[1]
    M = m_ref.shape[0]

    gblk = g_ref[...]                                 # (tg, F)
    memb = m_ref[...]                                 # (M, F)

    b1 = pk_ref[0:1, :]                               # (1, H)
    v = pk_ref[1:2, :]                                # (1, H)
    w3b = pk_ref[2:3, :]                              # (1, F)  (F == H)
    c = pk_ref[3:4, 0:1]                              # (1, 1)

    # Layer-1 halves of the concat Linear (MXU):  A[g] = hu_g @ W1a, B[m] = hv_m @ W1b
    a = jnp.dot(gblk, w1_ref[0:F, :], preferred_element_type=jnp.float32)        # (tg, H)
    b_scr[...] = jnp.dot(memb, w1_ref[F:2 * F, :],
                         preferred_element_type=jnp.float32)                     # (M, H)

    # (hu*hv) @ w3b  ==  gblk @ (memb * w3b).T  — one lane-dense MXU matmul.
    mscaled = (memb * w3b).astype(gblk.dtype)                                    # (M, F)
    s2 = jax.lax.dot_general(gblk, mscaled, (((1,), (1,)), ((), ())),
                             preferred_element_type=jnp.float32)                 # (tg, M)

    acc0 = s2 + c                                                                # (tg, M)

    # Per-edge nonlinearity: score[:, m] += relu(A + B[m] + b1) . v   (VPU + XLU reduce)
    def body(m, acc):
        b_row = b_scr[pl.ds(m, 1), :]                                            # (1, H)
        z = jnp.maximum(a + b_row + b1, 0.0)                                     # (tg, H)
        sm = jnp.sum(z * v, axis=-1, keepdims=True)                              # (tg, 1)
        col = (jax.lax.broadcasted_iota(jnp.int32, (1, M), 1) == m
               ).astype(jnp.float32)                                             # (1, M)
        return acc + sm * col

    scores = jax.lax.fori_loop(0, M, body, acc0, unroll=(M <= 32))
    out_ref[...] = scores.astype(out_ref.dtype)


def ncf_predict_pallas(graph_emb, model_emb, params, *, tg=128,
                       compute_dtype=jnp.float32):
    """NCF scores for every (graph, model) pair -> (num_graphs, num_models)."""
    graph_emb = jnp.asarray(graph_emb, jnp.float32)
    model_emb = jnp.asarray(model_emb, jnp.float32)
    G, F = graph_emb.shape
    M, F2 = model_emb.shape
    H = params["b1"].shape[0]
    assert F == F2, "graph/model embeddings must share feature width"
    assert F == H, "NCFPredictor structurally requires in_feats == hid_feats"

    # ---- parameter re-layout + algebraic fusion (tiny, done once) ----
    w1t = jnp.asarray(params["w1"], jnp.float32).T            # (2F, H)
    w3 = jnp.asarray(params["w3"], jnp.float32).reshape(-1)   # (2H,)
    w3a, w3b = w3[:H], w3[H:]
    v = jnp.asarray(params["w2"], jnp.float32).T @ w3a        # (H,)
    c = (jnp.dot(jnp.asarray(params["b2"], jnp.float32), w3a)
         + jnp.asarray(params["b3"], jnp.float32).reshape(()))
    pk = jnp.stack([jnp.asarray(params["b1"], jnp.float32),
                    v,
                    w3b,
                    jnp.zeros((H,), jnp.float32).at[0].set(c)], axis=0)   # (4, H)

    # ---- graph tiling (pad G to a tile multiple if needed) ----
    if G <= tg:
        tg_eff, g_pad = G, G
    else:
        tg_eff = max(8, (tg // 8) * 8)
        g_pad = ((G + tg_eff - 1) // tg_eff) * tg_eff
    g_in = graph_emb if g_pad == G else jnp.pad(graph_emb, ((0, g_pad - G), (0, 0)))

    g_in = g_in.astype(compute_dtype)
    m_in = model_emb.astype(compute_dtype)
    w1t = w1t.astype(compute_dtype)

    grid = (g_pad // tg_eff,)
    scores = pl.pallas_call(
        ncf_kernel,
        out_shape=jax.ShapeDtypeStruct((g_pad, M), jnp.float32),
        grid_spec=pltpu.PrefetchScalarGridSpec(
            num_scalar_prefetch=0,
            grid=grid,
            in_specs=[
                pl.BlockSpec((tg_eff, F), lambda i: (i, 0)),   # graph tile
                pl.BlockSpec((M, F), lambda i: (0, 0)),        # model table (resident)
                pl.BlockSpec((2 * F, H), lambda i: (0, 0)),    # packed W1.T
                pl.BlockSpec((4, H), lambda i: (0, 0)),        # packed small params
            ],
            out_specs=pl.BlockSpec((tg_eff, M), lambda i: (i, 0)),
            scratch_shapes=[pltpu.VMEM((M, H), jnp.float32)],
        ),
        compiler_params=pltpu.CompilerParams(
            dimension_semantics=("parallel",)),
    )(g_in, m_in, w1t, pk)

    return scores[:G, :]


def ncf_predict_reference(graph_emb, model_emb, params):
    """Pure-JAX mirror of the PyTorch forward (concat + Linear form)."""
    G, F = graph_emb.shape
    M = model_emb.shape[0]
    hu = jnp.repeat(graph_emb, M, axis=0)
    hv = jnp.tile(model_emb, (G, 1))
    x = jnp.concatenate([hu, hv], axis=1)
    h = jnp.maximum(x @ params["w1"].T + params["b1"], 0.0)
    h = h @ params["w2"].T + params["b2"]
    cat2 = jnp.concatenate([h, hu * hv], axis=1)
    score = cat2 @ params["w3"].T + params["b3"]
    return score.reshape(G, M)


def init_params(key, in_feats, hid_feats):
    """Deterministic init mimicking nn.Linear default (uniform +-1/sqrt(fan_in))."""
    ks = jax.random.split(key, 6)

    def lin(kw, kb, fan_in, fan_out):
        bound = 1.0 / np.sqrt(fan_in)
        w = jax.random.uniform(kw, (fan_out, fan_in), jnp.float32, -bound, bound)
        b = jax.random.uniform(kb, (fan_out,), jnp.float32, -bound, bound)
        return w, b

    w1, b1 = lin(ks[0], ks[1], in_feats * 2, hid_feats)
    w2, b2 = lin(ks[2], ks[3], hid_feats, hid_feats)
    w3, b3 = lin(ks[4], ks[5], hid_feats * 2, 1)
    return {"w1": w1, "b1": b1, "w2": w2, "b2": b2, "w3": w3, "b3": b3}


if __name__ == "__main__":
    # NOTE: the PyTorch module implicitly requires in_feats == hid_feats
    # (last_W expects hid*2 = hid + in_feats).
    in_feats = 32
    hid_feats = 32
    num_graphs = 16
    num_models = 8

    key = jax.random.PRNGKey(0)
    k_g, k_m, k_p = jax.random.split(key, 3)
    graph_emb = jax.random.normal(k_g, (num_graphs, in_feats), jnp.float32)
    model_emb = jax.random.normal(k_m, (num_models, in_feats), jnp.float32)
    params = init_params(k_p, in_feats, hid_feats)

    # tg=8 -> 2 evenly sized grid steps (megacore-friendly on v7x).
    out = ncf_predict_pallas(graph_emb, model_emb, params, tg=8)
    out = jax.block_until_ready(out)

    ref = ncf_predict_reference(graph_emb, model_emb, params)
    np.testing.assert_allclose(np.asarray(out), np.asarray(ref), rtol=1e-4, atol=1e-4)
    assert out.shape == (num_graphs, num_models)

    print("KERNEL_OK")
</pallas_src>

<mosaic_0001>
module attributes {stable_mosaic.version = 11 : i64} {
  func.func @ncf_kernel(%arg0: i32, %arg1: memref<8x32xf32, #tpu.memory_space<vmem>>, %arg2: memref<8x32xf32, #tpu.memory_space<vmem>>, %arg3: memref<64x32xf32, #tpu.memory_space<vmem>>, %arg4: memref<4x32xf32, #tpu.memory_space<vmem>>, %arg5: memref<8x8xf32, #tpu.memory_space<vmem>>, %arg6: memref<8x32xf32, #tpu.memory_space<vmem>>) attributes {dimension_semantics = [#tpu.dimension_semantics<parallel>], iteration_bounds = array<i64: 2>, scalar_prefetch = 0 : i64, scratch_operands = 1 : i64, tpu.core_type = #tpu.core_type<tc>, window_params = [{transform_indices = @transform_0, window_bounds = array<i64: 8, 32>}, {pipeline_mode = #tpu.pipeline_mode<synchronous>, transform_indices = @transform_1, window_bounds = array<i64: 8, 32>}, {pipeline_mode = #tpu.pipeline_mode<synchronous>, transform_indices = @transform_2, window_bounds = array<i64: 64, 32>}, {pipeline_mode = #tpu.pipeline_mode<synchronous>, transform_indices = @transform_3, window_bounds = array<i64: 4, 32>}, {transform_indices = @transform_4, window_bounds = array<i64: 8, 8>}]} {
    %c0 = arith.constant 0 : index
    %c0_0 = arith.constant 0 : index
    %0 = vector.load %arg1[%c0, %c0_0] : memref<8x32xf32, #tpu.memory_space<vmem>>, vector<8x32xf32>
    %c0_1 = arith.constant 0 : index
    %c0_2 = arith.constant 0 : index
    %1 = vector.load %arg2[%c0_1, %c0_2] : memref<8x32xf32, #tpu.memory_space<vmem>>, vector<8x32xf32>
    %c0_3 = arith.constant 0 : index
    %c0_4 = arith.constant 0 : index
    %2 = vector.load %arg4[%c0_3, %c0_4] : memref<4x32xf32, #tpu.memory_space<vmem>>, vector<1x32xf32>
    %c1 = arith.constant 1 : index
    %c0_5 = arith.constant 0 : index
    %3 = vector.load %arg4[%c1, %c0_5] : memref<4x32xf32, #tpu.memory_space<vmem>>, vector<1x32xf32>
    %c2 = arith.constant 2 : index
    %c0_6 = arith.constant 0 : index
    %4 = vector.load %arg4[%c2, %c0_6] : memref<4x32xf32, #tpu.memory_space<vmem>>, vector<1x32xf32>
    %c3 = arith.constant 3 : index
    %c0_7 = arith.constant 0 : index
    %5 = vector.load %arg4[%c3, %c0_7] : memref<4x32xf32, #tpu.memory_space<vmem>>, vector<1x1xf32>
    %c0_8 = arith.constant 0 : index
    %c0_9 = arith.constant 0 : index
    %6 = vector.load %arg3[%c0_8, %c0_9] : memref<64x32xf32, #tpu.memory_space<vmem>>, vector<32x32xf32>
    %cst = arith.constant dense<0.000000e+00> : vector<8x32xf32>
    %7 = tpu.matmul %0, %6, %cst {dimension_numbers = #tpu.dot_dimension_numbers<[1], [0], [0], [1], [0, 0, 1, 1], [], []>} : vector<8x32xf32>, vector<32x32xf32>, vector<8x32xf32> -> vector<8x32xf32>
    %c32 = arith.constant 32 : index
    %c0_10 = arith.constant 0 : index
    %8 = vector.load %arg3[%c32, %c0_10] : memref<64x32xf32, #tpu.memory_space<vmem>>, vector<32x32xf32>
    %cst_11 = arith.constant dense<0.000000e+00> : vector<8x32xf32>
    %9 = tpu.matmul %1, %8, %cst_11 {dimension_numbers = #tpu.dot_dimension_numbers<[1], [0], [0], [1], [0, 0, 1, 1], [], []>} : vector<8x32xf32>, vector<32x32xf32>, vector<8x32xf32> -> vector<8x32xf32>
    %c0_12 = arith.constant 0 : index
    %c0_13 = arith.constant 0 : index
    %10 = vector.load %arg6[%c0_12, %c0_13] : memref<8x32xf32, #tpu.memory_space<vmem>>, vector<8x32xf32>
    tpu.vector_store %arg6[%c0_12, %c0_13], %9 {strides = array<i32>} : memref<8x32xf32, #tpu.memory_space<vmem>>, vector<8x32xf32>,
    %11 = vector.broadcast %4 : vector<1x32xf32> to vector<8x32xf32>
    %12 = arith.mulf %1, %11 : vector<8x32xf32>
    %cst_14 = arith.constant dense<0.000000e+00> : vector<8x8xf32>
    %13 = tpu.matmul %0, %12, %cst_14 {dimension_numbers = #tpu.dot_dimension_numbers<[1], [1], [0], [0], [0, 0, 1, 0], [], []>} : vector<8x32xf32>, vector<8x32xf32>, vector<8x8xf32> -> vector<8x8xf32>
    %14 = vector.broadcast %5 : vector<1x1xf32> to vector<8x8xf32>
    %15 = arith.addf %13, %14 : vector<8x8xf32>
    %c0_i32 = arith.constant 0 : i32
    %16 = arith.index_cast %c0_i32 : i32 to index
    %c0_15 = arith.constant 0 : index
    %17 = vector.load %arg6[%16, %c0_15] : memref<8x32xf32, #tpu.memory_space<vmem>>, vector<1x32xf32>
    %18 = vector.broadcast %17 : vector<1x32xf32> to vector<8x32xf32>
    %19 = arith.addf %7, %18 : vector<8x32xf32>
    %20 = vector.broadcast %2 : vector<1x32xf32> to vector<8x32xf32>
    %21 = arith.addf %19, %20 : vector<8x32xf32>
    %cst_16 = arith.constant 0.000000e+00 : f32
    %22 = vector.broadcast %cst_16 : f32 to vector<8x32xf32>
    %23 = arith.maximumf %21, %22 : vector<8x32xf32>
    %24 = vector.broadcast %3 : vector<1x32xf32> to vector<8x32xf32>
    %25 = arith.mulf %23, %24 : vector<8x32xf32>
    %cst_17 = arith.constant dense<0.000000e+00> : vector<8xf32>
    %26 = vector.multi_reduction <add>, %25, %cst_17 [1] : vector<8x32xf32> to vector<8xf32>
    %27 = vector.shape_cast %26 : vector<8xf32> to vector<8x1xf32>
    %28 = tpu.iota {dimensions = array<i32: 1>} : vector<1x8xi32>
    %29 = vector.broadcast %c0_i32 : i32 to vector<1x8xi32>
    %30 = arith.cmpi eq, %28, %29 : vector<1x8xi32>
    %31 = arith.extui %30 : vector<1x8xi1> to vector<1x8xi32>
    %32 = arith.sitofp %31 : vector<1x8xi32> to vector<1x8xf32>
    %33 = vector.broadcast %27 : vector<8x1xf32> to vector<8x8xf32>
    %34 = vector.broadcast %32 : vector<1x8xf32> to vector<8x8xf32>
    %35 = arith.mulf %33, %34 : vector<8x8xf32>
    %36 = arith.addf %15, %35 : vector<8x8xf32>
    %c1_i32 = arith.constant 1 : i32
    %37 = arith.index_cast %c1_i32 : i32 to index
    %c0_18 = arith.constant 0 : index
    %38 = vector.load %arg6[%37, %c0_18] : memref<8x32xf32, #tpu.memory_space<vmem>>, vector<1x32xf32>
    %39 = vector.broadcast %38 : vector<1x32xf32> to vector<8x32xf32>
    %40 = arith.addf %7, %39 : vector<8x32xf32>
    %41 = vector.broadcast %2 : vector<1x32xf32> to vector<8x32xf32>
    %42 = arith.addf %40, %41 : vector<8x32xf32>
    %cst_19 = arith.constant 0.000000e+00 : f32
    %43 = vector.broadcast %cst_19 : f32 to vector<8x32xf32>
    %44 = arith.maximumf %42, %43 : vector<8x32xf32>
    %45 = vector.broadcast %3 : vector<1x32xf32> to vector<8x32xf32>
    %46 = arith.mulf %44, %45 : vector<8x32xf32>
    %cst_20 = arith.constant dense<0.000000e+00> : vector<8xf32>
    %47 = vector.multi_reduction <add>, %46, %cst_20 [1] : vector<8x32xf32> to vector<8xf32>
    %48 = vector.shape_cast %47 : vector<8xf32> to vector<8x1xf32>
    %49 = tpu.iota {dimensions = array<i32: 1>} : vector<1x8xi32>
    %50 = vector.broadcast %c1_i32 : i32 to vector<1x8xi32>
    %51 = arith.cmpi eq, %49, %50 : vector<1x8xi32>
    %52 = arith.extui %51 : vector<1x8xi1> to vector<1x8xi32>
    %53 = arith.sitofp %52 : vector<1x8xi32> to vector<1x8xf32>
    %54 = vector.broadcast %48 : vector<8x1xf32> to vector<8x8xf32>
    %55 = vector.broadcast %53 : vector<1x8xf32> to vector<8x8xf32>
    %56 = arith.mulf %54, %55 : vector<8x8xf32>
    %57 = arith.addf %36, %56 : vector<8x8xf32>
    %c2_i32 = arith.constant 2 : i32
    %58 = arith.index_cast %c2_i32 : i32 to index
    %c0_21 = arith.constant 0 : index
    %59 = vector.load %arg6[%58, %c0_21] : memref<8x32xf32, #tpu.memory_space<vmem>>, vector<1x32xf32>
    %60 = vector.broadcast %59 : vector<1x32xf32> to vector<8x32xf32>
    %61 = arith.addf %7, %60 : vector<8x32xf32>
    %62 = vector.broadcast %2 : vector<1x32xf32> to vector<8x32xf32>
    %63 = arith.addf %61, %62 : vector<8x32xf32>
    %cst_22 = arith.constant 0.000000e+00 : f32
    %64 = vector.broadcast %cst_22 : f32 to vector<8x32xf32>
    %65 = arith.maximumf %63, %64 : vector<8x32xf32>
    %66 = vector.broadcast %3 : vector<1x32xf32> to vector<8x32xf32>
    %67 = arith.mulf %65, %66 : vector<8x32xf32>
    %cst_23 = arith.constant dense<0.000000e+00> : vector<8xf32>
    %68 = vector.multi_reduction <add>, %67, %cst_23 [1] : vector<8x32xf32> to vector<8xf32>
    %69 = vector.shape_cast %68 : vector<8xf32> to vector<8x1xf32>
    %70 = tpu.iota {dimensions = array<i32: 1>} : vector<1x8xi32>
    %71 = vector.broadcast %c2_i32 : i32 to vector<1x8xi32>
    %72 = arith.cmpi eq, %70, %71 : vector<1x8xi32>
    %73 = arith.extui %72 : vector<1x8xi1> to vector<1x8xi32>
    %74 = arith.sitofp %73 : vector<1x8xi32> to vector<1x8xf32>
    %75 = vector.broadcast %69 : vector<8x1xf32> to vector<8x8xf32>
    %76 = vector.broadcast %74 : vector<1x8xf32> to vector<8x8xf32>
    %77 = arith.mulf %75, %76 : vector<8x8xf32>
    %78 = arith.addf %57, %77 : vector<8x8xf32>
    %c3_i32 = arith.constant 3 : i32
    %79 = arith.index_cast %c3_i32 : i32 to index
    %c0_24 = arith.constant 0 : index
    %80 = vector.load %arg6[%79, %c0_24] : memref<8x32xf32, #tpu.memory_space<vmem>>, vector<1x32xf32>
    %81 = vector.broadcast %80 : vector<1x32xf32> to vector<8x32xf32>
    %82 = arith.addf %7, %81 : vector<8x32xf32>
    %83 = vector.broadcast %2 : vector<1x32xf32> to vector<8x32xf32>
    %84 = arith.addf %82, %83 : vector<8x32xf32>
    %cst_25 = arith.constant 0.000000e+00 : f32
    %85 = vector.broadcast %cst_25 : f32 to vector<8x32xf32>
    %86 = arith.maximumf %84, %85 : vector<8x32xf32>
    %87 = vector.broadcast %3 : vector<1x32xf32> to vector<8x32xf32>
    %88 = arith.mulf %86, %87 : vector<8x32xf32>
    %cst_26 = arith.constant dense<0.000000e+00> : vector<8xf32>
    %89 = vector.multi_reduction <add>, %88, %cst_26 [1] : vector<8x32xf32> to vector<8xf32>
    %90 = vector.shape_cast %89 : vector<8xf32> to vector<8x1xf32>
    %91 = tpu.iota {dimensions = array<i32: 1>} : vector<1x8xi32>
    %92 = vector.broadcast %c3_i32 : i32 to vector<1x8xi32>
    %93 = arith.cmpi eq, %91, %92 : vector<1x8xi32>
    %94 = arith.extui %93 : vector<1x8xi1> to vector<1x8xi32>
    %95 = arith.sitofp %94 : vector<1x8xi32> to vector<1x8xf32>
    %96 = vector.broadcast %90 : vector<8x1xf32> to vector<8x8xf32>
    %97 = vector.broadcast %95 : vector<1x8xf32> to vector<8x8xf32>
    %98 = arith.mulf %96, %97 : vector<8x8xf32>
    %99 = arith.addf %78, %98 : vector<8x8xf32>
    %c4_i32 = arith.constant 4 : i32
    %100 = arith.index_cast %c4_i32 : i32 to index
    %c0_27 = arith.constant 0 : index
    %101 = vector.load %arg6[%100, %c0_27] : memref<8x32xf32, #tpu.memory_space<vmem>>, vector<1x32xf32>
    %102 = vector.broadcast %101 : vector<1x32xf32> to vector<8x32xf32>
    %103 = arith.addf %7, %102 : vector<8x32xf32>
    %104 = vector.broadcast %2 : vector<1x32xf32> to vector<8x32xf32>
    %105 = arith.addf %103, %104 : vector<8x32xf32>
    %cst_28 = arith.constant 0.000000e+00 : f32
    %106 = vector.broadcast %cst_28 : f32 to vector<8x32xf32>
    %107 = arith.maximumf %105, %106 : vector<8x32xf32>
    %108 = vector.broadcast %3 : vector<1x32xf32> to vector<8x32xf32>
    %109 = arith.mulf %107, %108 : vector<8x32xf32>
    %cst_29 = arith.constant dense<0.000000e+00> : vector<8xf32>
    %110 = vector.multi_reduction <add>, %109, %cst_29 [1] : vector<8x32xf32> to vector<8xf32>
    %111 = vector.shape_cast %110 : vector<8xf32> to vector<8x1xf32>
    %112 = tpu.iota {dimensions = array<i32: 1>} : vector<1x8xi32>
    %113 = vector.broadcast %c4_i32 : i32 to vector<1x8xi32>
    %114 = arith.cmpi eq, %112, %113 : vector<1x8xi32>
    %115 = arith.extui %114 : vector<1x8xi1> to vector<1x8xi32>
    %116 = arith.sitofp %115 : vector<1x8xi32> to vector<1x8xf32>
    %117 = vector.broadcast %111 : vector<8x1xf32> to vector<8x8xf32>
    %118 = vector.broadcast %116 : vector<1x8xf32> to vector<8x8xf32>
    %119 = arith.mulf %117, %118 : vector<8x8xf32>
    %120 = arith.addf %99, %119 : vector<8x8xf32>
    %c5_i32 = arith.constant 5 : i32
    %121 = arith.index_cast %c5_i32 : i32 to index
    %c0_30 = arith.constant 0 : index
    %122 = vector.load %arg6[%121, %c0_30] : memref<8x32xf32, #tpu.memory_space<vmem>>, vector<1x32xf32>
    %123 = vector.broadcast %122 : vector<1x32xf32> to vector<8x32xf32>
    %124 = arith.addf %7, %123 : vector<8x32xf32>
    %125 = vector.broadcast %2 : vector<1x32xf32> to vector<8x32xf32>
    %126 = arith.addf %124, %125 : vector<8x32xf32>
    %cst_31 = arith.constant 0.000000e+00 : f32
    %127 = vector.broadcast %cst_31 : f32 to vector<8x32xf32>
    %128 = arith.maximumf %126, %127 : vector<8x32xf32>
    %129 = vector.broadcast %3 : vector<1x32xf32> to vector<8x32xf32>
    %130 = arith.mulf %128, %129 : vector<8x32xf32>
    %cst_32 = arith.constant dense<0.000000e+00> : vector<8xf32>
    %131 = vector.multi_reduction <add>, %130, %cst_32 [1] : vector<8x32xf32> to vector<8xf32>
    %132 = vector.shape_cast %131 : vector<8xf32> to vector<8x1xf32>
    %133 = tpu.iota {dimensions = array<i32: 1>} : vector<1x8xi32>
    %134 = vector.broadcast %c5_i32 : i32 to vector<1x8xi32>
    %135 = arith.cmpi eq, %133, %134 : vector<1x8xi32>
    %136 = arith.extui %135 : vector<1x8xi1> to vector<1x8xi32>
    %137 = arith.sitofp %136 : vector<1x8xi32> to vector<1x8xf32>
    %138 = vector.broadcast %132 : vector<8x1xf32> to vector<8x8xf32>
    %139 = vector.broadcast %137 : vector<1x8xf32> to vector<8x8xf32>
    %140 = arith.mulf %138, %139 : vector<8x8xf32>
    %141 = arith.addf %120, %140 : vector<8x8xf32>
    %c6_i32 = arith.constant 6 : i32
    %142 = arith.index_cast %c6_i32 : i32 to index
    %c0_33 = arith.constant 0 : index
    %143 = vector.load %arg6[%142, %c0_33] : memref<8x32xf32, #tpu.memory_space<vmem>>, vector<1x32xf32>
    %144 = vector.broadcast %143 : vector<1x32xf32> to vector<8x32xf32>
    %145 = arith.addf %7, %144 : vector<8x32xf32>
    %146 = vector.broadcast %2 : vector<1x32xf32> to vector<8x32xf32>
    %147 = arith.addf %145, %146 : vector<8x32xf32>
    %cst_34 = arith.constant 0.000000e+00 : f32
    %148 = vector.broadcast %cst_34 : f32 to vector<8x32xf32>
    %149 = arith.maximumf %147, %148 : vector<8x32xf32>
    %150 = vector.broadcast %3 : vector<1x32xf32> to vector<8x32xf32>
    %151 = arith.mulf %149, %150 : vector<8x32xf32>
    %cst_35 = arith.constant dense<0.000000e+00> : vector<8xf32>
    %152 = vector.multi_reduction <add>, %151, %cst_35 [1] : vector<8x32xf32> to vector<8xf32>
    %153 = vector.shape_cast %152 : vector<8xf32> to vector<8x1xf32>
    %154 = tpu.iota {dimensions = array<i32: 1>} : vector<1x8xi32>
    %155 = vector.broadcast %c6_i32 : i32 to vector<1x8xi32>
    %156 = arith.cmpi eq, %154, %155 : vector<1x8xi32>
    %157 = arith.extui %156 : vector<1x8xi1> to vector<1x8xi32>
    %158 = arith.sitofp %157 : vector<1x8xi32> to vector<1x8xf32>
    %159 = vector.broadcast %153 : vector<8x1xf32> to vector<8x8xf32>
    %160 = vector.broadcast %158 : vector<1x8xf32> to vector<8x8xf32>
    %161 = arith.mulf %159, %160 : vector<8x8xf32>
    %162 = arith.addf %141, %161 : vector<8x8xf32>
    %c7_i32 = arith.constant 7 : i32
    %163 = arith.index_cast %c7_i32 : i32 to index
    %c0_36 = arith.constant 0 : index
    %164 = vector.load %arg6[%163, %c0_36] : memref<8x32xf32, #tpu.memory_space<vmem>>, vector<1x32xf32>
    %165 = vector.broadcast %164 : vector<1x32xf32> to vector<8x32xf32>
    %166 = arith.addf %7, %165 : vector<8x32xf32>
    %167 = vector.broadcast %2 : vector<1x32xf32> to vector<8x32xf32>
    %168 = arith.addf %166, %167 : vector<8x32xf32>
    %cst_37 = arith.constant 0.000000e+00 : f32
    %169 = vector.broadcast %cst_37 : f32 to vector<8x32xf32>
    %170 = arith.maximumf %168, %169 : vector<8x32xf32>
    %171 = vector.broadcast %3 : vector<1x32xf32> to vector<8x32xf32>
    %172 = arith.mulf %170, %171 : vector<8x32xf32>
    %cst_38 = arith.constant dense<0.000000e+00> : vector<8xf32>
    %173 = vector.multi_reduction <add>, %172, %cst_38 [1] : vector<8x32xf32> to vector<8xf32>
    %174 = vector.shape_cast %173 : vector<8xf32> to vector<8x1xf32>
    %175 = tpu.iota {dimensions = array<i32: 1>} : vector<1x8xi32>
    %176 = vector.broadcast %c7_i32 : i32 to vector<1x8xi32>
    %177 = arith.cmpi eq, %175, %176 : vector<1x8xi32>
    %178 = arith.extui %177 : vector<1x8xi1> to vector<1x8xi32>
    %179 = arith.sitofp %178 : vector<1x8xi32> to vector<1x8xf32>
    %180 = vector.broadcast %174 : vector<8x1xf32> to vector<8x8xf32>
    %181 = vector.broadcast %179 : vector<1x8xf32> to vector<8x8xf32>
    %182 = arith.mulf %180, %181 : vector<8x8xf32>
    %183 = arith.addf %162, %182 : vector<8x8xf32>
    %c8_i32 = arith.constant 8 : i32
    %c0_39 = arith.constant 0 : index
    %c0_40 = arith.constant 0 : index
    %184 = vector.load %arg5[%c0_39, %c0_40] : memref<8x8xf32, #tpu.memory_space<vmem>>, vector<8x8xf32>
    tpu.vector_store %arg5[%c0_39, %c0_40], %183 {strides = array<i32>} : memref<8x8xf32, #tpu.memory_space<vmem>>, vector<8x8xf32>,
    return
  }
  func.func @transform_0(%arg0: i32) -> (i32, i32) {
    %c0_i32 = arith.constant 0 : i32
    %c0_i32_0 = arith.constant 0 : i32
    return %arg0, %c0_i32 : i32, i32
  }
  func.func @transform_1(%arg0: i32) -> (i32, i32) {
    %c0_i32 = arith.constant 0 : i32
    %c0_i32_0 = arith.constant 0 : i32
    %c0_i32_1 = arith.constant 0 : i32
    return %c0_i32, %c0_i32_0 : i32, i32
  }
  func.func @transform_2(%arg0: i32) -> (i32, i32) {
    %c0_i32 = arith.constant 0 : i32
    %c0_i32_0 = arith.constant 0 : i32
    %c0_i32_1 = arith.constant 0 : i32
    return %c0_i32, %c0_i32_0 : i32, i32
  }
  func.func @transform_3(%arg0: i32) -> (i32, i32) {
    %c0_i32 = arith.constant 0 : i32
    %c0_i32_0 = arith.constant 0 : i32
    %c0_i32_1 = arith.constant 0 : i32
    return %c0_i32, %c0_i32_0 : i32, i32
  }
  func.func @transform_4(%arg0: i32) -> (i32, i32) {
    %c0_i32 = arith.constant 0 : i32
    %c0_i32_0 = arith.constant 0 : i32
    return %arg0, %c0_i32 : i32, i32
  }
}

</mosaic_0001>

<llo_original>
// kernel: tpu_custom_call.1
$region0: #{tpu_custom_call.1}
  #allocation0 [shape = 'u32[]', space=smem, size = 0x4, offset = 0x4, fixed_abs, tag = 'smem constant byte address 0x4 - core index']
  #allocation1 [shape = 'u32[72,128]{1,0:T(1,128)}', space=vmem, size = 0x9000, scoped, tag = 'internal scratch']
  #allocation2 [shape = 'f32[8,32]{1,0:T(8,128)}', space=vmem, size = 0x1000, scoped, tag = 'scratch operand']
  %s0 = inlined_call_operand.vmem [shape: f32[16,32], index: 0, kind: input, shape index: {}]
  %s1 = inlined_call_operand.vmem [shape: f32[8,32], index: 1, kind: input, shape index: {}]
  %s2 = inlined_call_operand.vmem [shape: f32[64,32], index: 2, kind: input, shape index: {}]
  %s3 = inlined_call_operand.vmem [shape: f32[4,32], index: 3, kind: input, shape index: {}]
  %s4 = inlined_call_operand.vmem [shape: f32[16,8], index: 4, kind: output, shape index: {}]
  %s5 = sld [smem:[#allocation0]]
  $region49: #{tpu_custom_call.1} parent=0
    _
  %s7 = ssub.s32 1, %s5
  %s8 = scalar_select 0, %s7, %s5
  loop: start=0, step=1, limit=4
  $region2: #{tpu_custom_call.1} parent=0 // loop_pre_header
    _
  $region3: #{tpu_custom_call.1} parent=0 // loop_header
    %s10 = sphi 0, %s14
    %p11 = scmp.ge.s32.totalorder %s10, 4
    %s20 = sphi 0, %s22
    %s23 = sphi 0, %s20
    %s24 = sphi 0, %s23
    %s40 = sphi 0, %s24
    %s44 = sphi 0, %s44
    %s46 = sphi 0, %s44
    %s47 = sphi 0, %s46
    %s61 = sphi 0, %s47
    %s65 = sphi 0, %s65
    %s67 = sphi 0, %s65
    %s68 = sphi 0, %s67
    %s82 = sphi 0, %s68
    %s86 = sphi 0, %s86
    %s88 = sphi 0, %s86
    %s89 = sphi 0, %s88
    %s103 = sphi 0, %s89
    %s109 = sphi 0, %s111
    %s112 = sphi 0, %s109
    %s113 = sphi 0, %s112
    %s129 = sphi 0, %s113
  $region4: #{tpu_custom_call.1} parent=0 // loop_header_branch
    %13 = sbr.rel (%p11) target = $region8
  $region5: #{tpu_custom_call.1} parent=0 // loop_body
    %s15 = ssub.s32 %s10, 1
    %s16 = ssub.s32 %s10, 2
    %s17 = sadd.s32 %s10, 1
    %s18 = ssub.s32 %s10, %s17
    %p19 = scmp.eq.s32.totalorder %s18, 0
    %s21 = sadd.s32 %s20, 1
    %s22 = scalar_select %p19, %s20, %s21
    %p25 = pneg %p19
    %p26 = scmp.eq.s32.totalorder %s10, 1
    %p27 = por %p25, %p26
    %p28 = scmp.ne.s32.totalorder %s20, %s23
    %p29 = scmp.eq.s32.totalorder %s10, 0
    %p30 = por %p28, %p29
    %p31 = scmp.ne.s32.totalorder %s20, %s23
    %p32 = scmp.eq.s32.totalorder %s15, 1
    %p33 = por %p31, %p32
    %p34 = scmp.ne.s32.totalorder %s23, %s24
    %p35 = scmp.eq.s32.totalorder %s15, 0
    %p36 = por %p34, %p35
    %p37 = scmp.ne.s32.totalorder %s23, %s24
    %p38 = scmp.eq.s32.totalorder %s16, 1
    %p39 = por %p37, %p38
    %p41 = scmp.ne.s32.totalorder %s24, %s40
    %p42 = scmp.eq.s32.totalorder %s16, 0
    %p43 = por %p41, %p42
    %s45 = sadd.s32 %s44, 1
    %p48 = scmp.eq.s32.totalorder %s10, 1
    %p49 = scmp.ne.s32.totalorder %s44, %s46
    %p50 = scmp.eq.s32.totalorder %s10, 0
    %p51 = por %p49, %p50
    %p52 = scmp.ne.s32.totalorder %s44, %s46
    %p53 = scmp.eq.s32.totalorder %s15, 1
    %p54 = por %p52, %p53
    %p55 = scmp.ne.s32.totalorder %s46, %s47
    %p56 = scmp.eq.s32.totalorder %s15, 0
    %p57 = por %p55, %p56
    %p58 = scmp.ne.s32.totalorder %s46, %s47
    %p59 = scmp.eq.s32.totalorder %s16, 1
    %p60 = por %p58, %p59
    %p62 = scmp.ne.s32.totalorder %s47, %s61
    %p63 = scmp.eq.s32.totalorder %s16, 0
    %p64 = por %p62, %p63
    %s66 = sadd.s32 %s65, 1
    %p69 = scmp.eq.s32.totalorder %s10, 1
    %p70 = scmp.ne.s32.totalorder %s65, %s67
    %p71 = scmp.eq.s32.totalorder %s10, 0
    %p72 = por %p70, %p71
    %p73 = scmp.ne.s32.totalorder %s65, %s67
    %p74 = scmp.eq.s32.totalorder %s15, 1
    %p75 = por %p73, %p74
    %p76 = scmp.ne.s32.totalorder %s67, %s68
    %p77 = scmp.eq.s32.totalorder %s15, 0
    %p78 = por %p76, %p77
    %p79 = scmp.ne.s32.totalorder %s67, %s68
    %p80 = scmp.eq.s32.totalorder %s16, 1
    %p81 = por %p79, %p80
    %p83 = scmp.ne.s32.totalorder %s68, %s82
    %p84 = scmp.eq.s32.totalorder %s16, 0
    %p85 = por %p83, %p84
    %s87 = sadd.s32 %s86, 1
    %p90 = scmp.eq.s32.totalorder %s10, 1
    %p91 = scmp.ne.s32.totalorder %s86, %s88
    %p92 = scmp.eq.s32.totalorder %s10, 0
    %p93 = por %p91, %p92
    %p94 = scmp.ne.s32.totalorder %s86, %s88
    %p95 = scmp.eq.s32.totalorder %s15, 1
    %p96 = por %p94, %p95
    %p97 = scmp.ne.s32.totalorder %s88, %s89
    %p98 = scmp.eq.s32.totalorder %s15, 0
    %p99 = por %p97, %p98
    %p100 = scmp.ne.s32.totalorder %s88, %s89
    %p101 = scmp.eq.s32.totalorder %s16, 1
    %p102 = por %p100, %p101
    %p104 = scmp.ne.s32.totalorder %s89, %s103
    %p105 = scmp.eq.s32.totalorder %s16, 0
    %p106 = por %p104, %p105
    %s107 = ssub.s32 %s10, %s17
    %p108 = scmp.eq.s32.totalorder %s107, 0
    %s110 = sadd.s32 %s109, 1
    %s111 = scalar_select %p108, %s109, %s110
    %p114 = pneg %p108
    %p115 = scmp.eq.s32.totalorder %s10, 1
    %p116 = por %p114, %p115
    %p117 = scmp.ne.s32.totalorder %s109, %s112
    %p118 = scmp.eq.s32.totalorder %s10, 0
    %p119 = por %p117, %p118
    %p120 = scmp.ne.s32.totalorder %s109, %s112
    %p121 = scmp.eq.s32.totalorder %s15, 1
    %p122 = por %p120, %p121
    %p123 = scmp.ne.s32.totalorder %s112, %s113
    %p124 = scmp.eq.s32.totalorder %s15, 0
    %p125 = por %p123, %p124
    %p126 = scmp.ne.s32.totalorder %s112, %s113
    %p127 = scmp.eq.s32.totalorder %s16, 1
    %p128 = por %p126, %p127
    %p130 = scmp.ne.s32.totalorder %s113, %s129
    %p131 = scmp.eq.s32.totalorder %s16, 0
    %p132 = por %p130, %p131
    %p133 = scmp.le.s32.totalorder 1, %s10
    %p134 = scmp.lt.s32.totalorder %s10, 3
    %p135 = pnand %p133, %p134
    %p136 = pneg %p135
    // Predicated region
    $region9: #{tpu_custom_call.1} parent=5 // pred_check
      _
    $region10: #{tpu_custom_call.1} parent=5 // pred_check_branch
      %138 = sbr.rel (%p135) target = $region12
    $region11: #{tpu_custom_call.1} parent=5 // pred_region
      %s139 = ssub.s32 %s10, 1
      // Predicated region
      $region13: #{tpu_custom_call.1} parent=11 // pred_check
        %p140 = pneg %p57
      $region14: #{tpu_custom_call.1} parent=11 // pred_check_branch
        %142 = sbr.rel (%p140) target = $region16
      $region15: #{tpu_custom_call.1} parent=11 // pred_region
        _
      $region16: #{tpu_custom_call.1} parent=11 // pred_fallthru
        _
      // Predicated region
      $region17: #{tpu_custom_call.1} parent=11 // pred_check
        %p143 = pneg %p78
      $region18: #{tpu_custom_call.1} parent=11 // pred_check_branch
        %145 = sbr.rel (%p143) target = $region20
      $region19: #{tpu_custom_call.1} parent=11 // pred_region
        _
      $region20: #{tpu_custom_call.1} parent=11 // pred_fallthru
        _
      // Predicated region
      $region21: #{tpu_custom_call.1} parent=11 // pred_check
        %p146 = pneg %p99
      $region22: #{tpu_custom_call.1} parent=11 // pred_check_branch
        %148 = sbr.rel (%p146) target = $region24
      $region23: #{tpu_custom_call.1} parent=11 // pred_region
        _
      $region24: #{tpu_custom_call.1} parent=11 // pred_fallthru
        _
    $region12: #{tpu_custom_call.1} parent=5 // pred_fallthru
      _
    %p149 = scmp.lt.s32.totalorder %s10, 2
    // Predicated region
    $region25: #{tpu_custom_call.1} parent=5 // pred_check
      %p150 = pneg %p149
    $region26: #{tpu_custom_call.1} parent=5 // pred_check_branch
      %152 = sbr.rel (%p150) target = $region28
    $region27: #{tpu_custom_call.1} parent=5 // pred_region
      // Predicated region
      $region29: #{tpu_custom_call.1} parent=27 // pred_check
        %p153 = pneg %p30
      $region30: #{tpu_custom_call.1} parent=27 // pred_check_branch
        %155 = sbr.rel (%p153) target = $region32
      $region31: #{tpu_custom_call.1} parent=27 // pred_region
        %p156 = scmp.lt.s32.totalorder %s10, 1
        %s157 = scalar_select %p156, %s10, 1
        %s158 = smul.addr %s157, 8
        %s159 = scalar_lea.vmem %s0, %s158
      $region32: #{tpu_custom_call.1} parent=27 // pred_fallthru
        _
    $region28: #{tpu_custom_call.1} parent=5 // pred_fallthru
      _
    %p160 = scmp.le.s32.totalorder 1, %s10
    %p161 = scmp.lt.s32.totalorder %s10, 3
    %p162 = pnand %p160, %p161
    %p163 = pneg %p162
    // Predicated region
    $region33: #{tpu_custom_call.1} parent=5 // pred_check
      _
    $region34: #{tpu_custom_call.1} parent=5 // pred_check_branch
      %165 = sbr.rel (%p162) target = $region36
    $region35: #{tpu_custom_call.1} parent=5 // pred_region
      %s166 = ssub.s32 %s10, 1
      %p167 = scmp.lt.s32.totalorder %s15, 1
      %s168 = scalar_select %p167, %s15, 1
      %s169 = smul.addr %s168, 8
      %s170 = scalar_lea.vmem %s0, %s169
      %p171 = pneg %p36
      %p172 = pneg %p33
      %p173 = pneg %p57
      %p174 = pneg %p54
      %p175 = pneg %p78
      %p176 = pneg %p75
      %p177 = pneg %p99
      %p178 = pneg %p96
      %p179 = pneg %p125
      %p180 = pneg %p122
      %p181 = scmp.lt.s32.totalorder %s15, 1
      %s182 = scalar_select %p181, %s15, 1
      %s183 = smul.addr %s182, 8
      %s184 = scalar_lea.vmem %s4, %s183
      %p185 = scmp.lt.s32.totalorder %s15, 1
      %s186 = scalar_select %p185, %s15, 1
      %s187 = smul.addr %s186, 8
      %s188 = scalar_lea.vmem %s0, %s187
      %p189 = scmp.lt.s32.totalorder %s15, 1
      %s190 = scalar_select %p189, %s15, 1
      %s191 = smul.addr %s190, 8
      %s192 = scalar_lea.vmem %s4, %s191
      %v193 = vld [vmem:[%s188] sm:$0xff]
      %v194 = vld [vmem:[%s1] sm:$0xff]
      %v195 = vld [vmem:[%s3] sm:$0x1]
      %v196 = vld [vmem:[%s3 + $0x1] sm:$0x1]
      %v197 = vld [vmem:[%s3 + $0x2] sm:$0x1]
      %v198 = vld [vmem:[%s3 + $0x3] sm:$0x1]
      %v199 = vld [vmem:[%s2] sm:$0xff]
      %v200 = vld [vmem:[%s2 + $0x8] sm:$0xff]
      %v201 = vld [vmem:[%s2 + $0x10] sm:$0xff]
      %v202 = vld [vmem:[%s2 + $0x18] sm:$0xff]
      %vm203 = vcmask 261120
      %v205 = vsel %vm203, %v193, 0
      %207 = vmatpush.msra.mxu0 0.0
      %208 = vmatpush.msra.mxu0 0.0
      %209 = vmatpush.msra.mxu0 0.0
      %210 = vmatpush.msra.mxu0 0.0
      %211 = vmatpush.msra.mxu0 0.0
      %212 = vmatpush.msra.mxu0 0.0
      %213 = vmatpush.msra.mxu0 0.0
      %214 = vmatpush.msra.mxu0 0.0
      %215 = vmatpush.msra.mxu0 0.0
      %216 = vmatpush.msra.mxu0 0.0
      %217 = vmatpush.msra.mxu0 0.0
      %218 = vmatpush.msra.mxu0 0.0
      %219 = vmatpush.msra.mxu0 %v202
      %220 = vmatpush.msra.mxu0 %v201
      %221 = vmatpush.msra.mxu0 %v200
      %222 = vmatpush.msra.mxu0 %v199
      %223 = vmatmul.f32.gmra.mxu0 %v205
      %v224 = vpop.f32.mrf.mxu0
      %v225 = vadd.f32 0.0, %v224
      %226 = vdwg.mxu0
      %v227 = vld [vmem:[%s2 + $0x20] sm:$0xff]
      %v228 = vld [vmem:[%s2 + $0x28] sm:$0xff]
      %v229 = vld [vmem:[%s2 + $0x30] sm:$0xff]
      %v230 = vld [vmem:[%s2 + $0x38] sm:$0xff]
      %v232 = vsel %vm203, %v194, 0
      %234 = vmatpush.msra.mxu0 0.0
      %235 = vmatpush.msra.mxu0 0.0
      %236 = vmatpush.msra.mxu0 0.0
      %237 = vmatpush.msra.mxu0 0.0
      %238 = vmatpush.msra.mxu0 0.0
      %239 = vmatpush.msra.mxu0 0.0
      %240 = vmatpush.msra.mxu0 0.0
      %241 = vmatpush.msra.mxu0 0.0
      %242 = vmatpush.msra.mxu0 0.0
      %243 = vmatpush.msra.mxu0 0.0
      %244 = vmatpush.msra.mxu0 0.0
      %245 = vmatpush.msra.mxu0 0.0
      %246 = vmatpush.msra.mxu0 %v230
      %247 = vmatpush.msra.mxu0 %v229
      %248 = vmatpush.msra.mxu0 %v228
      %249 = vmatpush.msra.mxu0 %v227
      %250 = vmatmul.f32.gmra.mxu0 %v232
      %v251 = vpop.f32.mrf.mxu0
      %v252 = vadd.f32 0.0, %v251
      %253 = vdwg.mxu0
      %254 = vst.msk [vmem:[#allocation2] sm:$0xff] %vm203, %v252
      %v255 = vperm.slane %v197, 0
      %v256 = vmul.f32 %v194, %v255
      %s258 = vtos %v198
      %v259 = vstv %s258
      %v262 = vsel %vm203, %v256, 0
      %264 = vmatpush.xpose.msra.mxu0 0.0
      %265 = vmatpush.xpose.msra.mxu0 0.0
      %266 = vmatpush.xpose.msra.mxu0 0.0
      %267 = vmatpush.xpose.msra.mxu0 0.0
      %268 = vmatpush.xpose.msra.mxu0 0.0
      %269 = vmatpush.xpose.msra.mxu0 0.0
      %270 = vmatpush.xpose.msra.mxu0 0.0
      %271 = vmatpush.xpose.msra.mxu0 0.0
      %272 = vmatpush.xpose.msra.mxu0 0.0
      %273 = vmatpush.xpose.msra.mxu0 0.0
      %274 = vmatpush.xpose.msra.mxu0 0.0
      %275 = vmatpush.xpose.msra.mxu0 0.0
      %276 = vmatpush.xpose.msra.mxu0 0.0
      %277 = vmatpush.xpose.msra.mxu0 0.0
      %278 = vmatpush.xpose.msra.mxu0 0.0
      %279 = vmatpush.xpose.msra.mxu0 %v262
      %280 = vmatmul.f32.gmra.mxu0 %v205
      %v281 = vpop.f32.mrf.mxu0
      %v282 = vadd.f32 %v259, %v281
      %283 = vdwg.mxu0
      %v284 = vld [vmem:[#allocation2] sm:$0x1]
      %v285 = vperm.slane %v284, 0
      %v286 = vadd.f32 %v225, %v285
      %v287 = vperm.slane %v195, 0
      %v288 = vadd.f32 %v286, %v287
      %v289 = vmax.f32 %v288, 0.0
      %v290 = vperm.slane %v196, 0
      %v291 = vmul.f32 %v289, %v290
      %v292 = vsel %vm203, %v291, 0.0
      %293 = vadd.xlane.f32.xlu0 %v292
      %v294 = vpop.xlane.xlu0 %293
      %v295 = vlaneseq
      %v296 = vand.u32 %v295, 127
      %vm297 = vcmp.eq.s32.totalorder %v296, 0
      %v298 = vsel %vm297, 1, 0
      %v299 = vcvt.s32.f32 %v298
      %v300 = vmul.f32 %v294, %v299
      %v301 = vadd.f32 %v282, %v300
      %v302 = vld [vmem:[#allocation2 + $0x1] sm:$0x1]
      %v303 = vperm.slane %v302, 0
      %v304 = vadd.f32 %v225, %v303
      %v305 = vadd.f32 %v304, %v287
      %v306 = vmax.f32 %v305, 0.0
      %v307 = vmul.f32 %v306, %v290
      %v308 = vsel %vm203, %v307, 0.0
      %309 = vadd.xlane.f32.xlu0 %v308
      %v310 = vpop.xlane.xlu0 %309
      %vm311 = vcmp.eq.s32.totalorder %v296, 1
      %v312 = vsel %vm311, 1, 0
      %v313 = vcvt.s32.f32 %v312
      %v314 = vmul.f32 %v310, %v313
      %v315 = vadd.f32 %v301, %v314
      %v316 = vld [vmem:[#allocation2 + $0x2] sm:$0x1]
      %v317 = vperm.slane %v316, 0
      %v318 = vadd.f32 %v225, %v317
      %v319 = vadd.f32 %v318, %v287
      %v320 = vmax.f32 %v319, 0.0
      %v321 = vmul.f32 %v320, %v290
      %v322 = vsel %vm203, %v321, 0.0
      %323 = vadd.xlane.f32.xlu0 %v322
      %v324 = vpop.xlane.xlu0 %323
      %vm325 = vcmp.eq.s32.totalorder %v296, 2
      %v326 = vsel %vm325, 1, 0
      %v327 = vcvt.s32.f32 %v326
      %v328 = vmul.f32 %v324, %v327
      %v329 = vadd.f32 %v315, %v328
      %v330 = vld [vmem:[#allocation2 + $0x3] sm:$0x1]
      %v331 = vperm.slane %v330, 0
      %v332 = vadd.f32 %v225, %v331
      %v333 = vadd.f32 %v332, %v287
      %v334 = vmax.f32 %v333, 0.0
      %v335 = vmul.f32 %v334, %v290
      %v336 = vsel %vm203, %v335, 0.0
      %337 = vadd.xlane.f32.xlu0 %v336
      %v338 = vpop.xlane.xlu0 %337
      %vm339 = vcmp.eq.s32.totalorder %v296, 3
      %v340 = vsel %vm339, 1, 0
      %v341 = vcvt.s32.f32 %v340
      %v342 = vmul.f32 %v338, %v341
      %v343 = vadd.f32 %v329, %v342
      %v344 = vld [vmem:[#allocation2 + $0x4] sm:$0x1]
      %v345 = vperm.slane %v344, 0
      %v346 = vadd.f32 %v225, %v345
      %v347 = vadd.f32 %v346, %v287
      %v348 = vmax.f32 %v347, 0.0
      %v349 = vmul.f32 %v348, %v290
      %v350 = vsel %vm203, %v349, 0.0
      %351 = vadd.xlane.f32.xlu0 %v350
      %v352 = vpop.xlane.xlu0 %351
      %vm353 = vcmp.eq.s32.totalorder %v296, 4
      %v354 = vsel %vm353, 1, 0
      %v355 = vcvt.s32.f32 %v354
      %v356 = vmul.f32 %v352, %v355
      %v357 = vadd.f32 %v343, %v356
      %v358 = vld [vmem:[#allocation2 + $0x5] sm:$0x1]
      %v359 = vperm.slane %v358, 0
      %v360 = vadd.f32 %v225, %v359
      %v361 = vadd.f32 %v360, %v287
      %v362 = vmax.f32 %v361, 0.0
      %v363 = vmul.f32 %v362, %v290
      %v364 = vsel %vm203, %v363, 0.0
      %365 = vadd.xlane.f32.xlu0 %v364
      %v366 = vpop.xlane.xlu0 %365
      %vm367 = vcmp.eq.s32.totalorder %v296, 5
      %v368 = vsel %vm367, 1, 0
      %v369 = vcvt.s32.f32 %v368
      %v370 = vmul.f32 %v366, %v369
      %v371 = vadd.f32 %v357, %v370
      %v372 = vld [vmem:[#allocation2 + $0x6] sm:$0x1]
      %v373 = vperm.slane %v372, 0
      %v374 = vadd.f32 %v225, %v373
      %v375 = vadd.f32 %v374, %v287
      %v376 = vmax.f32 %v375, 0.0
      %v377 = vmul.f32 %v376, %v290
      %v378 = vsel %vm203, %v377, 0.0
      %379 = vadd.xlane.f32.xlu0 %v378
      %v380 = vpop.xlane.xlu0 %379
      %vm381 = vcmp.eq.s32.totalorder %v296, 6
      %v382 = vsel %vm381, 1, 0
      %v383 = vcvt.s32.f32 %v382
      %v384 = vmul.f32 %v380, %v383
      %v385 = vadd.f32 %v371, %v384
      %v386 = vld [vmem:[#allocation2 + $0x7] sm:$0x1]
      %v387 = vperm.slane %v386, 0
      %v388 = vadd.f32 %v225, %v387
      %v389 = vadd.f32 %v388, %v287
      %v390 = vmax.f32 %v389, 0.0
      %v391 = vmul.f32 %v390, %v290
      %v392 = vsel %vm203, %v391, 0.0
      %393 = vadd.xlane.f32.xlu0 %v392
      %v394 = vpop.xlane.xlu0 %393
      %vm395 = vcmp.eq.s32.totalorder %v296, 7
      %v396 = vsel %vm395, 1, 0
      %v397 = vcvt.s32.f32 %v396
      %v398 = vmul.f32 %v394, %v397
      %v399 = vadd.f32 %v385, %v398
      %vm400 = vcmask 64512
      %401 = vst.msk [vmem:[%s192] sm:$0xff] %vm400, %v399
      %p402 = scmp.lt.s32.totalorder %s15, 1
      %s403 = scalar_select %p402, %s15, 1
      %s404 = smul.addr %s403, 8
      %s405 = scalar_lea.vmem %s4, %s404
      // Predicated region
      $region37: #{tpu_custom_call.1} parent=35 // pred_check
        %p406 = pneg %p122
      $region38: #{tpu_custom_call.1} parent=35 // pred_check_branch
        %408 = sbr.rel (%p406) target = $region40
      $region39: #{tpu_custom_call.1} parent=35 // pred_region
        _
      $region40: #{tpu_custom_call.1} parent=35 // pred_fallthru
        _
    $region36: #{tpu_custom_call.1} parent=5 // pred_fallthru
      _
    %p409 = scmp.le.s32.totalorder 2, %s10
    // Predicated region
    $region41: #{tpu_custom_call.1} parent=5 // pred_check
      %p410 = pneg %p409
    $region42: #{tpu_custom_call.1} parent=5 // pred_check_branch
      %412 = sbr.rel (%p410) target = $region44
    $region43: #{tpu_custom_call.1} parent=5 // pred_region
      %s413 = ssub.s32 %s10, 2
      // Predicated region
      $region45: #{tpu_custom_call.1} parent=43 // pred_check
        %p414 = pneg %p128
      $region46: #{tpu_custom_call.1} parent=43 // pred_check_branch
        %416 = sbr.rel (%p414) target = $region48
      $region47: #{tpu_custom_call.1} parent=43 // pred_region
        %p417 = scmp.lt.s32.totalorder %s16, 1
        %s418 = scalar_select %p417, %s16, 1
        %s419 = smul.addr %s418, 8
        %s420 = scalar_lea.vmem %s4, %s419
      $region48: #{tpu_custom_call.1} parent=43 // pred_fallthru
        _
    $region44: #{tpu_custom_call.1} parent=5 // pred_fallthru
      _
  $region6: #{tpu_custom_call.1} parent=0 // loop_footer
    %s14 = sadd.s32 1, %s10
  $region7: #{tpu_custom_call.1} parent=0 // loop_footer_branch
    %9 = sbr.rel target = $region3
  $region8: #{tpu_custom_call.1} parent=0 // loop_exit
    _

</llo_original>
